<compile_context>
chip_gen: v7x
topology: tpu7x:2x2x1
jax: 0.10.0
libtpu: 0.0.40
codegen_flags: <defaults>
</compile_context>

<pallas_src>
import functools

import jax
import jax.numpy as jnp
from jax.experimental import pallas as pl
from jax.experimental.pallas import tpu as pltpu


def _round_up(a, m):
    return (a + m - 1) // m * m


# ---------------------------------------------------------------------------
# Kernel: one batch tile of TB columns.
#   x_ref : (n_chunks*128, TB) bf16   -- transposed, zero-padded input tile
#   w_ref : ((n_chunks+5)*128, 128) bf16 -- packed, zero-padded weight slab
#   b_ref : (128, 8) f32              -- column j = bias of layer j+1 (padded)
#   o_ref : (1, TB) f32               -- lane-dense value row
# ---------------------------------------------------------------------------
def _valuenet_kernel(x_ref, w_ref, b_ref, o_ref, *, n_chunks):
    f32 = jnp.float32

    # ---- layer 1: H -> 128 (contraction chunked over 128-wide input blocks)
    acc = jnp.dot(w_ref[pl.ds(0, 128), :], x_ref[pl.ds(0, 128), :],
                  preferred_element_type=f32)
    for c in range(1, n_chunks):
        acc += jnp.dot(w_ref[pl.ds(c * 128, 128), :],
                       x_ref[pl.ds(c * 128, 128), :],
                       preferred_element_type=f32)
    h = jnp.maximum(acc + b_ref[:, 0:1], 0.0)                  # (128, TB) f32

    # ---- layers 2..5: 128->64->32->16->8, all padded to uniform 128x128 MXU
    off = n_chunks * 128
    for j in range(4):
        w = w_ref[pl.ds(off + j * 128, 128), :]                # (128,128) bf16
        acc = jnp.dot(w, h.astype(jnp.bfloat16),
                      preferred_element_type=f32)
        h = jnp.maximum(acc + b_ref[:, j + 1:j + 2], 0.0)      # (128, TB) f32

    # ---- layer 6: 8 -> 1 on VPU + sublane reduce (w6 stored as a column)
    w6 = w_ref[pl.ds(off + 4 * 128, 128), 0:1].astype(f32)     # (128, 1)
    v = jnp.sum(w6 * h, axis=0, keepdims=True) + b_ref[0:1, 5:6]  # (1, TB)
    o_ref[...] = v.astype(o_ref.dtype)


# ---------------------------------------------------------------------------
# Parameter packing: torch-layout params -> (bf16 weight slab, f32 bias block)
# ---------------------------------------------------------------------------
def _pack_params(params, H):
    C = -(-H // 128)                              # number of 128-wide input chunks
    w_slab = jnp.zeros(((C + 5) * 128, 128), jnp.float32)
    b_block = jnp.zeros((128, 8), jnp.float32)

    # layer 1: torch weight (128, H), split along the input dim
    w1, b1 = params[0]
    for c in range(C):
        lo = c * 128
        width = min(128, H - lo)
        w_slab = w_slab.at[c * 128:c * 128 + 128, :width].set(w1[:, lo:lo + width])
    b_block = b_block.at[:128, 0].set(b1)

    # layers 2..5: (out, in) placed in the top-left corner of a zero 128x128 block
    for j in range(1, 5):
        w, b = params[j]
        od, idim = w.shape
        blk = (C + j - 1) * 128
        w_slab = w_slab.at[blk:blk + od, :idim].set(w)
        b_block = b_block.at[:od, j].set(b)

    # layer 6: (1, 8) stored as a column so the kernel can use the VPU finale
    w6, b6 = params[5]
    blk = (C + 4) * 128
    w_slab = w_slab.at[blk:blk + 8, 0].set(w6[0, :])
    b_block = b_block.at[0, 5].set(b6[0])

    return w_slab.astype(jnp.bfloat16), b_block


# ---------------------------------------------------------------------------
# Wrapper: batch-tiled pallas_call.
# ---------------------------------------------------------------------------
def valuenet_forward(x, params, *, tb_max=512):
    """x: (B, lstm_hidden_dim) float32.  Returns (B,) float32, == squeeze(1)."""
    B, H = x.shape
    C = -(-H // 128)
    Hp = C * 128

    # Tile size: lane dim must be a multiple of 128; 256-1024 keeps per-step
    # overhead amortized while fitting comfortably in v7x's 64 MiB VMEM.
    TB = min(tb_max, _round_up(max(B, 1), 128))
    B_pad = _round_up(B, TB)

    w_slab, b_block = _pack_params(params, H)

    # Transpose + zero-pad x so batch lives on lanes (layout plumbing).
    xT = jnp.zeros((Hp, B_pad), jnp.bfloat16)
    xT = xT.at[:H, :B].set(x.T.astype(jnp.bfloat16))

    kernel = functools.partial(_valuenet_kernel, n_chunks=C)

    out = pl.pallas_call(
        kernel,
        out_shape=jax.ShapeDtypeStruct((1, B_pad), jnp.float32),
        grid_spec=pltpu.PrefetchScalarGridSpec(
            num_scalar_prefetch=0,
            grid=(B_pad // TB,),
            in_specs=[
                pl.BlockSpec((Hp, TB), lambda i: (0, i)),                # x tile
                pl.BlockSpec(((C + 5) * 128, 128), lambda i: (0, 0)),    # weights (resident)
                pl.BlockSpec((128, 8), lambda i: (0, 0)),                # biases (resident)
            ],
            out_specs=pl.BlockSpec((1, TB), lambda i: (0, i)),           # lane-dense
        ),
        compiler_params=pltpu.CompilerParams(
            dimension_semantics=("parallel",),          # 2 TCs on v7x
            vmem_limit_bytes=32 * 1024 * 1024,          # explicit, fits all gens
        ),
    )(xT, w_slab, b_block)

    return out[0, :B]


# ---------------------------------------------------------------------------
# Deterministic init mirroring the spec: weight (out, in) with each *input
# column* (sum over dim=0) normalized to L2 norm == std (exactly what the
# reference normalized_columns_initializer code does); bias keeps PyTorch's
# default nn.Linear init U(-1/sqrt(fan_in), 1/sqrt(fan_in)).
# ---------------------------------------------------------------------------
def init_valuenet_params(lstm_hidden_dim, key, std=1.0):
    dims = [lstm_hidden_dim, 128, 64, 32, 16, 8, 1]
    params = []
    for i in range(len(dims) - 1):
        fan_in, fan_out = dims[i], dims[i + 1]
        key, kw, kb = jax.random.split(key, 3)
        w = jax.random.normal(kw, (fan_out, fan_in), dtype=jnp.float32)
        col_norm = jnp.sqrt(jnp.sum(w ** 2, axis=0, keepdims=True))
        w = w * (std / col_norm)
        bound = 1.0 / float(fan_in) ** 0.5
        b = jax.random.uniform(kb, (fan_out,), jnp.float32, -bound, bound)
        params.append((w, b))
    return params


# ---------------------------------------------------------------------------
# References.
# ---------------------------------------------------------------------------
def valuenet_ref(x, params):
    """Pure f32 reference (torch semantics: y = x @ W.T + b)."""
    h = x
    for i, (w, b) in enumerate(params):
        h = h @ w.T + b
        if i < len(params) - 1:
            h = jnp.maximum(h, 0.0)
    return h[:, 0]


def valuenet_ref_bf16(x, params):
    """Emulates the kernel's bf16-MXU / f32-accumulate arithmetic."""
    h = jnp.dot(x.astype(jnp.bfloat16), params[0][0].T.astype(jnp.bfloat16),
                preferred_element_type=jnp.float32) + params[0][1]
    h = jnp.maximum(h, 0.0)
    for j in range(1, 5):
        w, b = params[j]
        h = jnp.dot(h.astype(jnp.bfloat16), w.T.astype(jnp.bfloat16),
                    preferred_element_type=jnp.float32) + b
        h = jnp.maximum(h, 0.0)
    w6, b6 = params[5]
    w6f = w6[0].astype(jnp.bfloat16).astype(jnp.float32)
    return jnp.sum(h * w6f, axis=-1) + b6[0]


if __name__ == "__main__":
    key = jax.random.PRNGKey(0)
    kx, kp = jax.random.split(key)

    B = 2
    lstm_hidden_dim = 32
    x = jax.random.normal(kx, (B, lstm_hidden_dim), dtype=jnp.float32)
    params = init_valuenet_params(lstm_hidden_dim, kp, std=1.0)

    out = jax.jit(valuenet_forward)(x, params)
    out = jax.block_until_ready(out)

    ref32 = valuenet_ref(x, params)
    ref16 = valuenet_ref_bf16(x, params)

    assert out.shape == (B,), out.shape
    assert jnp.allclose(out, ref16, atol=5e-3, rtol=5e-3), (out, ref16)
    assert jnp.allclose(out, ref32, atol=5e-2, rtol=5e-2), (out, ref32)

    print("KERNEL_OK")
</pallas_src>

<mosaic_0001>
module attributes {stable_mosaic.version = 11 : i64} {
  func.func @_valuenet_kernel(%arg0: i32, %arg1: memref<128x128xbf16, #tpu.memory_space<vmem>>, %arg2: memref<768x128xbf16, #tpu.memory_space<vmem>>, %arg3: memref<128x8xf32, #tpu.memory_space<vmem>>, %arg4: memref<1x128xf32, #tpu.memory_space<vmem>>) attributes {dimension_semantics = [#tpu.dimension_semantics<parallel>], iteration_bounds = array<i64: 1>, scalar_prefetch = 0 : i64, scratch_operands = 0 : i64, tpu.core_type = #tpu.core_type<tc>, window_params = [{transform_indices = @transform_0, window_bounds = array<i64: 128, 128>}, {pipeline_mode = #tpu.pipeline_mode<synchronous>, transform_indices = @transform_1, window_bounds = array<i64: 768, 128>}, {pipeline_mode = #tpu.pipeline_mode<synchronous>, transform_indices = @transform_2, window_bounds = array<i64: 128, 8>}, {transform_indices = @transform_3, window_bounds = array<i64: 1, 128>}]} {
    %c0 = arith.constant 0 : index
    %c0_0 = arith.constant 0 : index
    %0 = vector.load %arg2[%c0, %c0_0] : memref<768x128xbf16, #tpu.memory_space<vmem>>, vector<128x128xbf16>
    %c0_1 = arith.constant 0 : index
    %c0_2 = arith.constant 0 : index
    %1 = vector.load %arg1[%c0_1, %c0_2] : memref<128x128xbf16, #tpu.memory_space<vmem>>, vector<128x128xbf16>
    %cst = arith.constant dense<0.000000e+00> : vector<128x128xf32>
    %2 = tpu.matmul %0, %1, %cst {dimension_numbers = #tpu.dot_dimension_numbers<[1], [0], [0], [1], [0, 0, 1, 1], [], []>} : vector<128x128xbf16>, vector<128x128xbf16>, vector<128x128xf32> -> vector<128x128xf32>
    %c0_3 = arith.constant 0 : index
    %c0_4 = arith.constant 0 : index
    %3 = vector.load %arg3[%c0_3, %c0_4] : memref<128x8xf32, #tpu.memory_space<vmem>>, vector<128x1xf32>
    %4 = vector.broadcast %3 : vector<128x1xf32> to vector<128x128xf32>
    %5 = arith.addf %2, %4 : vector<128x128xf32>
    %cst_5 = arith.constant 0.000000e+00 : f32
    %6 = vector.broadcast %cst_5 : f32 to vector<128x128xf32>
    %7 = arith.maximumf %5, %6 : vector<128x128xf32>
    %c128 = arith.constant 128 : index
    %c0_6 = arith.constant 0 : index
    %8 = vector.load %arg2[%c128, %c0_6] : memref<768x128xbf16, #tpu.memory_space<vmem>>, vector<128x128xbf16>
    %9 = arith.truncf %7 : vector<128x128xf32> to vector<128x128xbf16>
    %cst_7 = arith.constant dense<0.000000e+00> : vector<128x128xf32>
    %10 = tpu.matmul %8, %9, %cst_7 {dimension_numbers = #tpu.dot_dimension_numbers<[1], [0], [0], [1], [0, 0, 1, 1], [], []>} : vector<128x128xbf16>, vector<128x128xbf16>, vector<128x128xf32> -> vector<128x128xf32>
    %c0_8 = arith.constant 0 : index
    %c1 = arith.constant 1 : index
    %11 = vector.load %arg3[%c0_8, %c1] : memref<128x8xf32, #tpu.memory_space<vmem>>, vector<128x1xf32>
    %12 = vector.broadcast %11 : vector<128x1xf32> to vector<128x128xf32>
    %13 = arith.addf %10, %12 : vector<128x128xf32>
    %cst_9 = arith.constant 0.000000e+00 : f32
    %14 = vector.broadcast %cst_9 : f32 to vector<128x128xf32>
    %15 = arith.maximumf %13, %14 : vector<128x128xf32>
    %c256 = arith.constant 256 : index
    %c0_10 = arith.constant 0 : index
    %16 = vector.load %arg2[%c256, %c0_10] : memref<768x128xbf16, #tpu.memory_space<vmem>>, vector<128x128xbf16>
    %17 = arith.truncf %15 : vector<128x128xf32> to vector<128x128xbf16>
    %cst_11 = arith.constant dense<0.000000e+00> : vector<128x128xf32>
    %18 = tpu.matmul %16, %17, %cst_11 {dimension_numbers = #tpu.dot_dimension_numbers<[1], [0], [0], [1], [0, 0, 1, 1], [], []>} : vector<128x128xbf16>, vector<128x128xbf16>, vector<128x128xf32> -> vector<128x128xf32>
    %c0_12 = arith.constant 0 : index
    %c2 = arith.constant 2 : index
    %19 = vector.load %arg3[%c0_12, %c2] : memref<128x8xf32, #tpu.memory_space<vmem>>, vector<128x1xf32>
    %20 = vector.broadcast %19 : vector<128x1xf32> to vector<128x128xf32>
    %21 = arith.addf %18, %20 : vector<128x128xf32>
    %cst_13 = arith.constant 0.000000e+00 : f32
    %22 = vector.broadcast %cst_13 : f32 to vector<128x128xf32>
    %23 = arith.maximumf %21, %22 : vector<128x128xf32>
    %c384 = arith.constant 384 : index
    %c0_14 = arith.constant 0 : index
    %24 = vector.load %arg2[%c384, %c0_14] : memref<768x128xbf16, #tpu.memory_space<vmem>>, vector<128x128xbf16>
    %25 = arith.truncf %23 : vector<128x128xf32> to vector<128x128xbf16>
    %cst_15 = arith.constant dense<0.000000e+00> : vector<128x128xf32>
    %26 = tpu.matmul %24, %25, %cst_15 {dimension_numbers = #tpu.dot_dimension_numbers<[1], [0], [0], [1], [0, 0, 1, 1], [], []>} : vector<128x128xbf16>, vector<128x128xbf16>, vector<128x128xf32> -> vector<128x128xf32>
    %c0_16 = arith.constant 0 : index
    %c3 = arith.constant 3 : index
    %27 = vector.load %arg3[%c0_16, %c3] : memref<128x8xf32, #tpu.memory_space<vmem>>, vector<128x1xf32>
    %28 = vector.broadcast %27 : vector<128x1xf32> to vector<128x128xf32>
    %29 = arith.addf %26, %28 : vector<128x128xf32>
    %cst_17 = arith.constant 0.000000e+00 : f32
    %30 = vector.broadcast %cst_17 : f32 to vector<128x128xf32>
    %31 = arith.maximumf %29, %30 : vector<128x128xf32>
    %c512 = arith.constant 512 : index
    %c0_18 = arith.constant 0 : index
    %32 = vector.load %arg2[%c512, %c0_18] : memref<768x128xbf16, #tpu.memory_space<vmem>>, vector<128x128xbf16>
    %33 = arith.truncf %31 : vector<128x128xf32> to vector<128x128xbf16>
    %cst_19 = arith.constant dense<0.000000e+00> : vector<128x128xf32>
    %34 = tpu.matmul %32, %33, %cst_19 {dimension_numbers = #tpu.dot_dimension_numbers<[1], [0], [0], [1], [0, 0, 1, 1], [], []>} : vector<128x128xbf16>, vector<128x128xbf16>, vector<128x128xf32> -> vector<128x128xf32>
    %c0_20 = arith.constant 0 : index
    %c4 = arith.constant 4 : index
    %35 = vector.load %arg3[%c0_20, %c4] : memref<128x8xf32, #tpu.memory_space<vmem>>, vector<128x1xf32>
    %36 = vector.broadcast %35 : vector<128x1xf32> to vector<128x128xf32>
    %37 = arith.addf %34, %36 : vector<128x128xf32>
    %cst_21 = arith.constant 0.000000e+00 : f32
    %38 = vector.broadcast %cst_21 : f32 to vector<128x128xf32>
    %39 = arith.maximumf %37, %38 : vector<128x128xf32>
    %c640 = arith.constant 640 : index
    %c0_22 = arith.constant 0 : index
    %40 = vector.load %arg2[%c640, %c0_22] : memref<768x128xbf16, #tpu.memory_space<vmem>>, vector<128x1xbf16>
    %41 = arith.extf %40 : vector<128x1xbf16> to vector<128x1xf32>
    %42 = vector.broadcast %41 : vector<128x1xf32> to vector<128x128xf32>
    %43 = arith.mulf %42, %39 : vector<128x128xf32>
    %cst_23 = arith.constant dense<0.000000e+00> : vector<128xf32>
    %44 = vector.multi_reduction <add>, %43, %cst_23 [0] : vector<128x128xf32> to vector<128xf32>
    %45 = vector.shape_cast %44 : vector<128xf32> to vector<1x128xf32>
    %c0_24 = arith.constant 0 : index
    %c5 = arith.constant 5 : index
    %46 = vector.load %arg3[%c0_24, %c5] : memref<128x8xf32, #tpu.memory_space<vmem>>, vector<1x1xf32>
    %47 = vector.broadcast %46 : vector<1x1xf32> to vector<1x128xf32>
    %48 = arith.addf %45, %47 : vector<1x128xf32>
    %c0_25 = arith.constant 0 : index
    %c0_26 = arith.constant 0 : index
    %49 = vector.load %arg4[%c0_25, %c0_26] : memref<1x128xf32, #tpu.memory_space<vmem>>, vector<1x128xf32>
    tpu.vector_store %arg4[%c0_25, %c0_26], %48 {strides = array<i32>} : memref<1x128xf32, #tpu.memory_space<vmem>>, vector<1x128xf32>,
    return
  }
  func.func @transform_0(%arg0: i32) -> (i32, i32) {
    %c0_i32 = arith.constant 0 : i32
    %c0_i32_0 = arith.constant 0 : i32
    return %c0_i32, %arg0 : i32, i32
  }
  func.func @transform_1(%arg0: i32) -> (i32, i32) {
    %c0_i32 = arith.constant 0 : i32
    %c0_i32_0 = arith.constant 0 : i32
    %c0_i32_1 = arith.constant 0 : i32
    return %c0_i32, %c0_i32_0 : i32, i32
  }
  func.func @transform_2(%arg0: i32) -> (i32, i32) {
    %c0_i32 = arith.constant 0 : i32
    %c0_i32_0 = arith.constant 0 : i32
    %c0_i32_1 = arith.constant 0 : i32
    return %c0_i32, %c0_i32_0 : i32, i32
  }
  func.func @transform_3(%arg0: i32) -> (i32, i32) {
    %c0_i32 = arith.constant 0 : i32
    %c0_i32_0 = arith.constant 0 : i32
    return %c0_i32, %arg0 : i32, i32
  }
}

</mosaic_0001>

<llo_original>
// kernel: valuenet_forward.1
$region0: #{valuenet_forward.1}
  #allocation0 [shape = 'u32[]', space=smem, size = 0x4, offset = 0x4, fixed_abs, tag = 'smem constant byte address 0x4 - core index']
  #allocation1 [shape = 'u32[144,128]{1,0:T(1,128)}', space=vmem, size = 0x12000, scoped, tag = 'internal scratch']
  %s0 = inlined_call_operand.vmem [shape: bf16[128,128], index: 0, kind: input, shape index: {}]
  %s1 = inlined_call_operand.vmem [shape: bf16[768,128], index: 1, kind: input, shape index: {}]
  %s2 = inlined_call_operand.vmem [shape: f32[128,8], index: 2, kind: input, shape index: {}]
  %s3 = inlined_call_operand.vmem [shape: f32[1,128], index: 3, kind: output, shape index: {}]
  %s4 = sld [smem:[#allocation0]]
  $region22: #{valuenet_forward.1} parent=0
    _
  %s6 = ssub.s32 1, %s4
  %s7 = scalar_select 0, %s6, %s4
  // Predicated region
  $region2: #{valuenet_forward.1} parent=0 // pred_check
    _
  $region3: #{valuenet_forward.1} parent=0 // pred_check_branch
    %9 = sbr.rel (0) target = $region5
  $region4: #{valuenet_forward.1} parent=0 // pred_region
    _
  $region5: #{valuenet_forward.1} parent=0 // pred_fallthru
    _
  // Predicated region
  $region6: #{valuenet_forward.1} parent=0 // pred_check
    _
  $region7: #{valuenet_forward.1} parent=0 // pred_check_branch
    %11 = sbr.rel (0) target = $region9
  $region8: #{valuenet_forward.1} parent=0 // pred_region
    _
  $region9: #{valuenet_forward.1} parent=0 // pred_fallthru
    _
  // Predicated region
  $region10: #{valuenet_forward.1} parent=0 // pred_check
    _
  $region11: #{valuenet_forward.1} parent=0 // pred_check_branch
    %13 = sbr.rel (0) target = $region13
  $region12: #{valuenet_forward.1} parent=0 // pred_region
    _
  $region13: #{valuenet_forward.1} parent=0 // pred_fallthru
    _
  %v15 = vld [vmem:[%s1] sm:$0xf]
  %v16 = vld [vmem:[%s1 + $0x4] sm:$0xf]
  %v17 = vld [vmem:[%s1 + $0x8] sm:$0xf]
  %v18 = vld [vmem:[%s1 + $0xc] sm:$0xf]
  %v19 = vld [vmem:[%s1 + $0x10] sm:$0xf]
  %v20 = vld [vmem:[%s1 + $0x14] sm:$0xf]
  %v21 = vld [vmem:[%s1 + $0x18] sm:$0xf]
  %v22 = vld [vmem:[%s1 + $0x1c] sm:$0xf]
  %v23 = vld [vmem:[%s1 + $0x20] sm:$0xf]
  %v24 = vld [vmem:[%s1 + $0x24] sm:$0xf]
  %v25 = vld [vmem:[%s1 + $0x28] sm:$0xf]
  %v26 = vld [vmem:[%s1 + $0x2c] sm:$0xf]
  %v27 = vld [vmem:[%s1 + $0x30] sm:$0xf]
  %v28 = vld [vmem:[%s1 + $0x34] sm:$0xf]
  %v29 = vld [vmem:[%s1 + $0x38] sm:$0xf]
  %v30 = vld [vmem:[%s1 + $0x3c] sm:$0xf]
  %v31 = vld [vmem:[%s0] sm:$0xf]
  %v32 = vld [vmem:[%s0 + $0x4] sm:$0xf]
  %v33 = vld [vmem:[%s0 + $0x8] sm:$0xf]
  %v34 = vld [vmem:[%s0 + $0xc] sm:$0xf]
  %v35 = vld [vmem:[%s0 + $0x10] sm:$0xf]
  %v36 = vld [vmem:[%s0 + $0x14] sm:$0xf]
  %v37 = vld [vmem:[%s0 + $0x18] sm:$0xf]
  %v38 = vld [vmem:[%s0 + $0x1c] sm:$0xf]
  %v39 = vld [vmem:[%s0 + $0x20] sm:$0xf]
  %v40 = vld [vmem:[%s0 + $0x24] sm:$0xf]
  %v41 = vld [vmem:[%s0 + $0x28] sm:$0xf]
  %v42 = vld [vmem:[%s0 + $0x2c] sm:$0xf]
  %v43 = vld [vmem:[%s0 + $0x30] sm:$0xf]
  %v44 = vld [vmem:[%s0 + $0x34] sm:$0xf]
  %v45 = vld [vmem:[%s0 + $0x38] sm:$0xf]
  %v46 = vld [vmem:[%s0 + $0x3c] sm:$0xf]
  %v47 = vld [vmem:[%s2] sm:$0xff]
  %v48 = vld [vmem:[%s2 + $0x8] sm:$0xff]
  %v49 = vld [vmem:[%s2 + $0x10] sm:$0xff]
  %v50 = vld [vmem:[%s2 + $0x18] sm:$0xff]
  %v51 = vld [vmem:[%s2 + $0x20] sm:$0xff]
  %v52 = vld [vmem:[%s2 + $0x28] sm:$0xff]
  %v53 = vld [vmem:[%s2 + $0x30] sm:$0xff]
  %v54 = vld [vmem:[%s2 + $0x38] sm:$0xff]
  %v55 = vld [vmem:[%s2 + $0x40] sm:$0xff]
  %v56 = vld [vmem:[%s2 + $0x48] sm:$0xff]
  %v57 = vld [vmem:[%s2 + $0x50] sm:$0xff]
  %v58 = vld [vmem:[%s2 + $0x58] sm:$0xff]
  %v59 = vld [vmem:[%s2 + $0x60] sm:$0xff]
  %v60 = vld [vmem:[%s2 + $0x68] sm:$0xff]
  %v61 = vld [vmem:[%s2 + $0x70] sm:$0xff]
  %v62 = vld [vmem:[%s2 + $0x78] sm:$0xff]
  %64 = vset.pattern.permute.xlu0 0
  %65 = vperm.xlu0 %64, %v47
  %v66 = vpop.permute.xlu0 %65
  %69 = vset.pattern.permute.xlu0 0
  %70 = vperm.xlu0 %69, %v48
  %v71 = vpop.permute.xlu0 %70
  %74 = vset.pattern.permute.xlu0 0
  %75 = vperm.xlu0 %74, %v49
  %v76 = vpop.permute.xlu0 %75
  %79 = vset.pattern.permute.xlu0 0
  %80 = vperm.xlu0 %79, %v50
  %v81 = vpop.permute.xlu0 %80
  %84 = vset.pattern.permute.xlu0 0
  %85 = vperm.xlu0 %84, %v51
  %v86 = vpop.permute.xlu0 %85
  %89 = vset.pattern.permute.xlu0 0
  %90 = vperm.xlu0 %89, %v52
  %v91 = vpop.permute.xlu0 %90
  %94 = vset.pattern.permute.xlu0 0
  %95 = vperm.xlu0 %94, %v53
  %v96 = vpop.permute.xlu0 %95
  %99 = vset.pattern.permute.xlu0 0
  %100 = vperm.xlu0 %99, %v54
  %v101 = vpop.permute.xlu0 %100
  %104 = vset.pattern.permute.xlu0 0
  %105 = vperm.xlu0 %104, %v55
  %v106 = vpop.permute.xlu0 %105
  %109 = vset.pattern.permute.xlu0 0
  %110 = vperm.xlu0 %109, %v56
  %v111 = vpop.permute.xlu0 %110
  %114 = vset.pattern.permute.xlu0 0
  %115 = vperm.xlu0 %114, %v57
  %v116 = vpop.permute.xlu0 %115
  %119 = vset.pattern.permute.xlu0 0
  %120 = vperm.xlu0 %119, %v58
  %v121 = vpop.permute.xlu0 %120
  %124 = vset.pattern.permute.xlu0 0
  %125 = vperm.xlu0 %124, %v59
  %v126 = vpop.permute.xlu0 %125
  %129 = vset.pattern.permute.xlu0 0
  %130 = vperm.xlu0 %129, %v60
  %v131 = vpop.permute.xlu0 %130
  %134 = vset.pattern.permute.xlu0 0
  %135 = vperm.xlu0 %134, %v61
  %v136 = vpop.permute.xlu0 %135
  %139 = vset.pattern.permute.xlu0 0
  %140 = vperm.xlu0 %139, %v62
  %v141 = vpop.permute.xlu0 %140
  %v159 = vunpack.c.l.b16 %v15
  %v160 = vunpack.c.l.b16 %v16
  %v161 = vunpack.c.l.b16 %v17
  %v162 = vunpack.c.l.b16 %v18
  %v163 = vunpack.c.l.b16 %v19
  %v164 = vunpack.c.l.b16 %v20
  %v165 = vunpack.c.l.b16 %v21
  %v166 = vunpack.c.l.b16 %v22
  %v167 = vunpack.c.l.b16 %v23
  %v168 = vunpack.c.l.b16 %v24
  %v169 = vunpack.c.l.b16 %v25
  %v170 = vunpack.c.l.b16 %v26
  %v171 = vunpack.c.l.b16 %v27
  %v172 = vunpack.c.l.b16 %v28
  %v173 = vunpack.c.l.b16 %v29
  %v174 = vunpack.c.l.b16 %v30
  %v175 = vpack.c.b16 %v160, %v159
  %v176 = vpack.c.b16 %v162, %v161
  %v177 = vpack.c.b16 %v164, %v163
  %v178 = vpack.c.b16 %v166, %v165
  %v179 = vpack.c.b16 %v168, %v167
  %v180 = vpack.c.b16 %v170, %v169
  %v181 = vpack.c.b16 %v172, %v171
  %v182 = vpack.c.b16 %v174, %v173
  %v207 = vunpack.c.l.b16 %v31
  %v208 = vunpack.c.l.b16 %v32
  %v209 = vunpack.c.l.b16 %v33
  %v210 = vunpack.c.l.b16 %v34
  %v211 = vunpack.c.l.b16 %v35
  %v212 = vunpack.c.l.b16 %v36
  %v213 = vunpack.c.l.b16 %v37
  %v214 = vunpack.c.l.b16 %v38
  %v215 = vunpack.c.l.b16 %v39
  %v216 = vunpack.c.l.b16 %v40
  %v217 = vunpack.c.l.b16 %v41
  %v218 = vunpack.c.l.b16 %v42
  %v219 = vunpack.c.l.b16 %v43
  %v220 = vunpack.c.l.b16 %v44
  %v221 = vunpack.c.l.b16 %v45
  %v222 = vunpack.c.l.b16 %v46
  %v223 = vpack.c.b16 %v208, %v207
  %v224 = vpack.c.b16 %v210, %v209
  %v225 = vpack.c.b16 %v212, %v211
  %v226 = vpack.c.b16 %v214, %v213
  %v227 = vpack.c.b16 %v216, %v215
  %v228 = vpack.c.b16 %v218, %v217
  %v229 = vpack.c.b16 %v220, %v219
  %v230 = vpack.c.b16 %v222, %v221
  %239 = vmatprep.subr.bf16.mxu0 0
  %240 = vmatpush1.bf16.msra.mxu0 %v223
  %241 = vmatprep.subr.bf16.mxu0 0
  %242 = vmatpush1.bf16.msra.mxu0 %v224
  %243 = vmatprep.subr.bf16.mxu0 0
  %244 = vmatpush1.bf16.msra.mxu0 %v225
  %245 = vmatprep.subr.bf16.mxu0 0
  %246 = vmatpush1.bf16.msra.mxu0 %v226
  %247 = vmatprep.subr.bf16.mxu0 0
  %248 = vmatpush1.bf16.msra.mxu0 %v227
  %249 = vmatprep.subr.bf16.mxu0 0
  %250 = vmatpush1.bf16.msra.mxu0 %v228
  %251 = vmatprep.subr.bf16.mxu0 0
  %252 = vmatpush1.bf16.msra.mxu0 %v229
  %253 = vmatprep.subr.bf16.mxu0 0
  %254 = vmatpush1.bf16.msra.mxu0 %v230
  %255 = vmatprep.subr.bf16.mxu0 0
  %256 = vmatpush1.bf16.msra.mxu0 0
  %257 = vmatprep.subr.bf16.mxu0 0
  %258 = vmatpush1.bf16.msra.mxu0 0
  %259 = vmatprep.subr.bf16.mxu0 0
  %260 = vmatpush1.bf16.msra.mxu0 0
  %261 = vmatprep.subr.bf16.mxu0 0
  %262 = vmatpush1.bf16.msra.mxu0 0
  %263 = vmatprep.subr.bf16.mxu0 0
  %264 = vmatpush1.bf16.msra.mxu0 0
  %265 = vmatprep.subr.bf16.mxu0 0
  %266 = vmatpush1.bf16.msra.mxu0 0
  %267 = vmatprep.subr.bf16.mxu0 0
  %268 = vmatpush1.bf16.msra.mxu0 0
  %269 = vmatprep.subr.bf16.mxu0 0
  %270 = vmatpush1.bf16.msra.mxu0 0
  %271 = vmatprep.mubr.bf16.mxu0 0
  %272 = vmatmul.mubr.bf16.gmra.mrb[0].mxu0 %v175
  %v273 = vpop.f32.mrb[0].mxu0
  %v274 = vadd.f32 %v66, %v273
  %v275 = vpop.f32.mrb[0].mxu0
  %v276 = vpop.f32.mrb[0].mxu0
  %v277 = vadd.f32 %v71, %v276
  %v278 = vpop.f32.mrb[0].mxu0
  %279 = vmatprep.mubr.bf16.mxu0 0
  %280 = vmatmul.mubr.bf16.gmra.mrb[0].mxu0 %v176
  %v281 = vpop.f32.mrb[0].mxu0
  %v282 = vadd.f32 %v76, %v281
  %v283 = vpop.f32.mrb[0].mxu0
  %v284 = vpop.f32.mrb[0].mxu0
  %v285 = vadd.f32 %v81, %v284
  %v286 = vpop.f32.mrb[0].mxu0
  %287 = vmatprep.mubr.bf16.mxu0 0
  %288 = vmatmul.mubr.bf16.gmra.mrb[0].mxu0 %v177
  %v289 = vpop.f32.mrb[0].mxu0
  %v290 = vadd.f32 %v86, %v289
  %v291 = vpop.f32.mrb[0].mxu0
  %v292 = vpop.f32.mrb[0].mxu0
  %v293 = vadd.f32 %v91, %v292
  %v294 = vpop.f32.mrb[0].mxu0
  %295 = vmatprep.mubr.bf16.mxu0 0
  %296 = vmatmul.mubr.bf16.gmra.mrb[0].mxu0 %v178
  %v297 = vpop.f32.mrb[0].mxu0
  %v298 = vadd.f32 %v96, %v297
  %v299 = vpop.f32.mrb[0].mxu0
  %v300 = vpop.f32.mrb[0].mxu0
  %v301 = vadd.f32 %v101, %v300
  %v302 = vpop.f32.mrb[0].mxu0
  %303 = vmatprep.mubr.bf16.mxu0 0
  %304 = vmatmul.mubr.bf16.gmra.mrb[0].mxu0 %v179
  %v305 = vpop.f32.mrb[0].mxu0
  %v306 = vadd.f32 %v106, %v305
  %v307 = vpop.f32.mrb[0].mxu0
  %v308 = vpop.f32.mrb[0].mxu0
  %v309 = vadd.f32 %v111, %v308
  %v310 = vpop.f32.mrb[0].mxu0
  %311 = vmatprep.mubr.bf16.mxu0 0
  %312 = vmatmul.mubr.bf16.gmra.mrb[0].mxu0 %v180
  %v313 = vpop.f32.mrb[0].mxu0
  %v314 = vadd.f32 %v116, %v313
  %v315 = vpop.f32.mrb[0].mxu0
  %v316 = vpop.f32.mrb[0].mxu0
  %v317 = vadd.f32 %v121, %v316
  %v318 = vpop.f32.mrb[0].mxu0
  %319 = vmatprep.mubr.bf16.mxu0 0
  %320 = vmatmul.mubr.bf16.gmra.mrb[0].mxu0 %v181
  %v321 = vpop.f32.mrb[0].mxu0
  %v322 = vadd.f32 %v126, %v321
  %v323 = vpop.f32.mrb[0].mxu0
  %v324 = vpop.f32.mrb[0].mxu0
  %v325 = vadd.f32 %v131, %v324
  %v326 = vpop.f32.mrb[0].mxu0
  %327 = vmatprep.mubr.bf16.mxu0 0
  %328 = vmatmul.mubr.bf16.gmra.mrb[0].mxu0 %v182
  %v329 = vpop.f32.mrb[0].mxu0
  %v330 = vadd.f32 %v136, %v329
  %v331 = vpop.f32.mrb[0].mxu0
  %v332 = vpop.f32.mrb[0].mxu0
  %v333 = vadd.f32 %v141, %v332
  %v334 = vpop.f32.mrb[0].mxu0
  %335 = vdwg.mxu0
  %v336 = vmax.f32 %v274, 0.0
  %v337 = vmax.f32 %v277, 0.0
  %v338 = vmax.f32 %v282, 0.0
  %v339 = vmax.f32 %v285, 0.0
  %v340 = vmax.f32 %v290, 0.0
  %v341 = vmax.f32 %v293, 0.0
  %v342 = vmax.f32 %v298, 0.0
  %v343 = vmax.f32 %v301, 0.0
  %v344 = vmax.f32 %v306, 0.0
  %v345 = vmax.f32 %v309, 0.0
  %v346 = vmax.f32 %v314, 0.0
  %v347 = vmax.f32 %v317, 0.0
  %v348 = vmax.f32 %v322, 0.0
  %v349 = vmax.f32 %v325, 0.0
  %v350 = vmax.f32 %v330, 0.0
  %v351 = vmax.f32 %v333, 0.0
  %v352 = vld [vmem:[%s1 + $0x40] sm:$0xf]
  %v353 = vld [vmem:[%s1 + $0x44] sm:$0xf]
  %v354 = vld [vmem:[%s1 + $0x48] sm:$0xf]
  %v355 = vld [vmem:[%s1 + $0x4c] sm:$0xf]
  %v356 = vld [vmem:[%s1 + $0x50] sm:$0xf]
  %v357 = vld [vmem:[%s1 + $0x54] sm:$0xf]
  %v358 = vld [vmem:[%s1 + $0x58] sm:$0xf]
  %v359 = vld [vmem:[%s1 + $0x5c] sm:$0xf]
  %v360 = vld [vmem:[%s1 + $0x60] sm:$0xf]
  %v361 = vld [vmem:[%s1 + $0x64] sm:$0xf]
  %v362 = vld [vmem:[%s1 + $0x68] sm:$0xf]
  %v363 = vld [vmem:[%s1 + $0x6c] sm:$0xf]
  %v364 = vld [vmem:[%s1 + $0x70] sm:$0xf]
  %v365 = vld [vmem:[%s1 + $0x74] sm:$0xf]
  %v366 = vld [vmem:[%s1 + $0x78] sm:$0xf]
  %v367 = vld [vmem:[%s1 + $0x7c] sm:$0xf]
  %v368 = vpack.c.bf16 %v337, %v336
  %v369 = vpack.c.bf16 %v339, %v338
  %v370 = vpack.c.bf16 %v341, %v340
  %v371 = vpack.c.bf16 %v343, %v342
  %v372 = vpack.c.bf16 %v345, %v344
  %v373 = vpack.c.bf16 %v347, %v346
  %v374 = vpack.c.bf16 %v349, %v348
  %v375 = vpack.c.bf16 %v351, %v350
  %376 = vset.pattern.permute.xlu0 1
  %377 = vperm.xlu0 %376, %v47
  %v378 = vpop.permute.xlu0 %377
  %380 = vset.pattern.permute.xlu0 1
  %381 = vperm.xlu0 %380, %v48
  %v382 = vpop.permute.xlu0 %381
  %384 = vset.pattern.permute.xlu0 1
  %385 = vperm.xlu0 %384, %v49
  %v386 = vpop.permute.xlu0 %385
  %388 = vset.pattern.permute.xlu0 1
  %389 = vperm.xlu0 %388, %v50
  %v390 = vpop.permute.xlu0 %389
  %392 = vset.pattern.permute.xlu0 1
  %393 = vperm.xlu0 %392, %v51
  %v394 = vpop.permute.xlu0 %393
  %396 = vset.pattern.permute.xlu0 1
  %397 = vperm.xlu0 %396, %v52
  %v398 = vpop.permute.xlu0 %397
  %400 = vset.pattern.permute.xlu0 1
  %401 = vperm.xlu0 %400, %v53
  %v402 = vpop.permute.xlu0 %401
  %404 = vset.pattern.permute.xlu0 1
  %405 = vperm.xlu0 %404, %v54
  %v406 = vpop.permute.xlu0 %405
  %408 = vset.pattern.permute.xlu0 1
  %409 = vperm.xlu0 %408, %v55
  %v410 = vpop.permute.xlu0 %409
  %412 = vset.pattern.permute.xlu0 1
  %413 = vperm.xlu0 %412, %v56
  %v414 = vpop.permute.xlu0 %413
  %416 = vset.pattern.permute.xlu0 1
  %417 = vperm.xlu0 %416, %v57
  %v418 = vpop.permute.xlu0 %417
  %420 = vset.pattern.permute.xlu0 1
  %421 = vperm.xlu0 %420, %v58
  %v422 = vpop.permute.xlu0 %421
  %424 = vset.pattern.permute.xlu0 1
  %425 = vperm.xlu0 %424, %v59
  %v426 = vpop.permute.xlu0 %425
  %428 = vset.pattern.permute.xlu0 1
  %429 = vperm.xlu0 %428, %v60
  %v430 = vpop.permute.xlu0 %429
  %432 = vset.pattern.permute.xlu0 1
  %433 = vperm.xlu0 %432, %v61
  %v434 = vpop.permute.xlu0 %433
  %436 = vset.pattern.permute.xlu0 1
  %437 = vperm.xlu0 %436, %v62
  %v438 = vpop.permute.xlu0 %437
  %v456 = vunpack.c.l.b16 %v352
  %v457 = vunpack.c.l.b16 %v353
  %v458 = vunpack.c.l.b16 %v354
  %v459 = vunpack.c.l.b16 %v355
  %v460 = vunpack.c.l.b16 %v356
  %v461 = vunpack.c.l.b16 %v357
  %v462 = vunpack.c.l.b16 %v358
  %v463 = vunpack.c.l.b16 %v359
  %v464 = vunpack.c.l.b16 %v360
  %v465 = vunpack.c.l.b16 %v361
  %v466 = vunpack.c.l.b16 %v362
  %v467 = vunpack.c.l.b16 %v363
  %v468 = vunpack.c.l.b16 %v364
  %v469 = vunpack.c.l.b16 %v365
  %v470 = vunpack.c.l.b16 %v366
  %v471 = vunpack.c.l.b16 %v367
  %v472 = vpack.c.b16 %v457, %v456
  %v473 = vpack.c.b16 %v459, %v458
  %v474 = vpack.c.b16 %v461, %v460
  %v475 = vpack.c.b16 %v463, %v462
  %v476 = vpack.c.b16 %v465, %v464
  %v477 = vpack.c.b16 %v467, %v466
  %v478 = vpack.c.b16 %v469, %v468
  %v479 = vpack.c.b16 %v471, %v470
  %488 = vmatprep.subr.bf16.mxu0 0
  %489 = vmatpush1.bf16.msra.mxu0 %v368
  %490 = vmatprep.subr.bf16.mxu0 0
  %491 = vmatpush1.bf16.msra.mxu0 %v369
  %492 = vmatprep.subr.bf16.mxu0 0
  %493 = vmatpush1.bf16.msra.mxu0 %v370
  %494 = vmatprep.subr.bf16.mxu0 0
  %495 = vmatpush1.bf16.msra.mxu0 %v371
  %496 = vmatprep.subr.bf16.mxu0 0
  %497 = vmatpush1.bf16.msra.mxu0 %v372
  %498 = vmatprep.subr.bf16.mxu0 0
  %499 = vmatpush1.bf16.msra.mxu0 %v373
  %500 = vmatprep.subr.bf16.mxu0 0
  %501 = vmatpush1.bf16.msra.mxu0 %v374
  %502 = vmatprep.subr.bf16.mxu0 0
  %503 = vmatpush1.bf16.msra.mxu0 %v375
  %504 = vmatprep.subr.bf16.mxu0 0
  %505 = vmatpush1.bf16.msra.mxu0 0
  %506 = vmatprep.subr.bf16.mxu0 0
  %507 = vmatpush1.bf16.msra.mxu0 0
  %508 = vmatprep.subr.bf16.mxu0 0
  %509 = vmatpush1.bf16.msra.mxu0 0
  %510 = vmatprep.subr.bf16.mxu0 0
  %511 = vmatpush1.bf16.msra.mxu0 0
  %512 = vmatprep.subr.bf16.mxu0 0
  %513 = vmatpush1.bf16.msra.mxu0 0
  %514 = vmatprep.subr.bf16.mxu0 0
  %515 = vmatpush1.bf16.msra.mxu0 0
  %516 = vmatprep.subr.bf16.mxu0 0
  %517 = vmatpush1.bf16.msra.mxu0 0
  %518 = vmatprep.subr.bf16.mxu0 0
  %519 = vmatpush1.bf16.msra.mxu0 0
  %520 = vmatprep.mubr.bf16.mxu0 0
  %521 = vmatmul.mubr.bf16.gmra.mrb[0].mxu0 %v472
  %v522 = vpop.f32.mrb[0].mxu0
  %v523 = vadd.f32 %v378, %v522
  %v524 = vpop.f32.mrb[0].mxu0
  %v525 = vpop.f32.mrb[0].mxu0
  %v526 = vadd.f32 %v382, %v525
  %v527 = vpop.f32.mrb[0].mxu0
  %528 = vmatprep.mubr.bf16.mxu0 0
  %529 = vmatmul.mubr.bf16.gmra.mrb[0].mxu0 %v473
  %v530 = vpop.f32.mrb[0].mxu0
  %v531 = vadd.f32 %v386, %v530
  %v532 = vpop.f32.mrb[0].mxu0
  %v533 = vpop.f32.mrb[0].mxu0
  %v534 = vadd.f32 %v390, %v533
  %v535 = vpop.f32.mrb[0].mxu0
  %536 = vmatprep.mubr.bf16.mxu0 0
  %537 = vmatmul.mubr.bf16.gmra.mrb[0].mxu0 %v474
  %v538 = vpop.f32.mrb[0].mxu0
  %v539 = vadd.f32 %v394, %v538
  %v540 = vpop.f32.mrb[0].mxu0
  %v541 = vpop.f32.mrb[0].mxu0
  %v542 = vadd.f32 %v398, %v541
  %v543 = vpop.f32.mrb[0].mxu0
  %544 = vmatprep.mubr.bf16.mxu0 0
  %545 = vmatmul.mubr.bf16.gmra.mrb[0].mxu0 %v475
  %v546 = vpop.f32.mrb[0].mxu0
  %v547 = vadd.f32 %v402, %v546
  %v548 = vpop.f32.mrb[0].mxu0
  %v549 = vpop.f32.mrb[0].mxu0
  %v550 = vadd.f32 %v406, %v549
  %v551 = vpop.f32.mrb[0].mxu0
  %552 = vmatprep.mubr.bf16.mxu0 0
  %553 = vmatmul.mubr.bf16.gmra.mrb[0].mxu0 %v476
  %v554 = vpop.f32.mrb[0].mxu0
  %v555 = vadd.f32 %v410, %v554
  %v556 = vpop.f32.mrb[0].mxu0
  %v557 = vpop.f32.mrb[0].mxu0
  %v558 = vadd.f32 %v414, %v557
  %v559 = vpop.f32.mrb[0].mxu0
  %560 = vmatprep.mubr.bf16.mxu0 0
  %561 = vmatmul.mubr.bf16.gmra.mrb[0].mxu0 %v477
  %v562 = vpop.f32.mrb[0].mxu0
  %v563 = vadd.f32 %v418, %v562
  %v564 = vpop.f32.mrb[0].mxu0
  %v565 = vpop.f32.mrb[0].mxu0
  %v566 = vadd.f32 %v422, %v565
  %v567 = vpop.f32.mrb[0].mxu0
  %568 = vmatprep.mubr.bf16.mxu0 0
  %569 = vmatmul.mubr.bf16.gmra.mrb[0].mxu0 %v478
  %v570 = vpop.f32.mrb[0].mxu0
  %v571 = vadd.f32 %v426, %v570
  %v572 = vpop.f32.mrb[0].mxu0
  %v573 = vpop.f32.mrb[0].mxu0
  %v574 = vadd.f32 %v430, %v573
  %v575 = vpop.f32.mrb[0].mxu0
  %576 = vmatprep.mubr.bf16.mxu0 0
  %577 = vmatmul.mubr.bf16.gmra.mrb[0].mxu0 %v479
  %v578 = vpop.f32.mrb[0].mxu0
  %v579 = vadd.f32 %v434, %v578
  %v580 = vpop.f32.mrb[0].mxu0
  %v581 = vpop.f32.mrb[0].mxu0
  %v582 = vadd.f32 %v438, %v581
  %v583 = vpop.f32.mrb[0].mxu0
  %584 = vdwg.mxu0
  %v585 = vmax.f32 %v523, 0.0
  %v586 = vmax.f32 %v526, 0.0
  %v587 = vmax.f32 %v531, 0.0
  %v588 = vmax.f32 %v534, 0.0
  %v589 = vmax.f32 %v539, 0.0
  %v590 = vmax.f32 %v542, 0.0
  %v591 = vmax.f32 %v547, 0.0
  %v592 = vmax.f32 %v550, 0.0
  %v593 = vmax.f32 %v555, 0.0
  %v594 = vmax.f32 %v558, 0.0
  %v595 = vmax.f32 %v563, 0.0
  %v596 = vmax.f32 %v566, 0.0
  %v597 = vmax.f32 %v571, 0.0
  %v598 = vmax.f32 %v574, 0.0
  %v599 = vmax.f32 %v579, 0.0
  %v600 = vmax.f32 %v582, 0.0
  %v601 = vld [vmem:[%s1 + $0x80] sm:$0xf]
  %v602 = vld [vmem:[%s1 + $0x84] sm:$0xf]
  %v603 = vld [vmem:[%s1 + $0x88] sm:$0xf]
  %v604 = vld [vmem:[%s1 + $0x8c] sm:$0xf]
  %v605 = vld [vmem:[%s1 + $0x90] sm:$0xf]
  %v606 = vld [vmem:[%s1 + $0x94] sm:$0xf]
  %v607 = vld [vmem:[%s1 + $0x98] sm:$0xf]
  %v608 = vld [vmem:[%s1 + $0x9c] sm:$0xf]
  %v609 = vld [vmem:[%s1 + $0xa0] sm:$0xf]
  %v610 = vld [vmem:[%s1 + $0xa4] sm:$0xf]
  %v611 = vld [vmem:[%s1 + $0xa8] sm:$0xf]
  %v612 = vld [vmem:[%s1 + $0xac] sm:$0xf]
  %v613 = vld [vmem:[%s1 + $0xb0] sm:$0xf]
  %v614 = vld [vmem:[%s1 + $0xb4] sm:$0xf]
  %v615 = vld [vmem:[%s1 + $0xb8] sm:$0xf]
  %v616 = vld [vmem:[%s1 + $0xbc] sm:$0xf]
  %v617 = vpack.c.bf16 %v586, %v585
  %v618 = vpack.c.bf16 %v588, %v587
  %v619 = vpack.c.bf16 %v590, %v589
  %v620 = vpack.c.bf16 %v592, %v591
  %v621 = vpack.c.bf16 %v594, %v593
  %v622 = vpack.c.bf16 %v596, %v595
  %v623 = vpack.c.bf16 %v598, %v597
  %v624 = vpack.c.bf16 %v600, %v599
  %625 = vset.pattern.permute.xlu0 2
  %626 = vperm.xlu0 %625, %v47
  %v627 = vpop.permute.xlu0 %626
  %629 = vset.pattern.permute.xlu0 2
  %630 = vperm.xlu0 %629, %v48
  %v631 = vpop.permute.xlu0 %630
  %633 = vset.pattern.permute.xlu0 2
  %634 = vperm.xlu0 %633, %v49
  %v635 = vpop.permute.xlu0 %634
  %637 = vset.pattern.permute.xlu0 2
  %638 = vperm.xlu0 %637, %v50
  %v639 = vpop.permute.xlu0 %638
  %641 = vset.pattern.permute.xlu0 2
  %642 = vperm.xlu0 %641, %v51
  %v643 = vpop.permute.xlu0 %642
  %645 = vset.pattern.permute.xlu0 2
  %646 = vperm.xlu0 %645, %v52
  %v647 = vpop.permute.xlu0 %646
  %649 = vset.pattern.permute.xlu0 2
  %650 = vperm.xlu0 %649, %v53
  %v651 = vpop.permute.xlu0 %650
  %653 = vset.pattern.permute.xlu0 2
  %654 = vperm.xlu0 %653, %v54
  %v655 = vpop.permute.xlu0 %654
  %657 = vset.pattern.permute.xlu0 2
  %658 = vperm.xlu0 %657, %v55
  %v659 = vpop.permute.xlu0 %658
  %661 = vset.pattern.permute.xlu0 2
  %662 = vperm.xlu0 %661, %v56
  %v663 = vpop.permute.xlu0 %662
  %665 = vset.pattern.permute.xlu0 2
  %666 = vperm.xlu0 %665, %v57
  %v667 = vpop.permute.xlu0 %666
  %669 = vset.pattern.permute.xlu0 2
  %670 = vperm.xlu0 %669, %v58
  %v671 = vpop.permute.xlu0 %670
  %673 = vset.pattern.permute.xlu0 2
  %674 = vperm.xlu0 %673, %v59
  %v675 = vpop.permute.xlu0 %674
  %677 = vset.pattern.permute.xlu0 2
  %678 = vperm.xlu0 %677, %v60
  %v679 = vpop.permute.xlu0 %678
  %681 = vset.pattern.permute.xlu0 2
  %682 = vperm.xlu0 %681, %v61
  %v683 = vpop.permute.xlu0 %682
  %685 = vset.pattern.permute.xlu0 2
  %686 = vperm.xlu0 %685, %v62
  %v687 = vpop.permute.xlu0 %686
  %v705 = vunpack.c.l.b16 %v601
  %v706 = vunpack.c.l.b16 %v602
  %v707 = vunpack.c.l.b16 %v603
  %v708 = vunpack.c.l.b16 %v604
  %v709 = vunpack.c.l.b16 %v605
  %v710 = vunpack.c.l.b16 %v606
  %v711 = vunpack.c.l.b16 %v607
  %v712 = vunpack.c.l.b16 %v608
  %v713 = vunpack.c.l.b16 %v609
  %v714 = vunpack.c.l.b16 %v610
  %v715 = vunpack.c.l.b16 %v611
  %v716 = vunpack.c.l.b16 %v612
  %v717 = vunpack.c.l.b16 %v613
  %v718 = vunpack.c.l.b16 %v614
  %v719 = vunpack.c.l.b16 %v615
  %v720 = vunpack.c.l.b16 %v616
  %v721 = vpack.c.b16 %v706, %v705
  %v722 = vpack.c.b16 %v708, %v707
  %v723 = vpack.c.b16 %v710, %v709
  %v724 = vpack.c.b16 %v712, %v711
  %v725 = vpack.c.b16 %v714, %v713
  %v726 = vpack.c.b16 %v716, %v715
  %v727 = vpack.c.b16 %v718, %v717
  %v728 = vpack.c.b16 %v720, %v719
  %737 = vmatprep.subr.bf16.mxu0 0
  %738 = vmatpush1.bf16.msra.mxu0 %v617
  %739 = vmatprep.subr.bf16.mxu0 0
  %740 = vmatpush1.bf16.msra.mxu0 %v618
  %741 = vmatprep.subr.bf16.mxu0 0
  %742 = vmatpush1.bf16.msra.mxu0 %v619
  %743 = vmatprep.subr.bf16.mxu0 0
  %744 = vmatpush1.bf16.msra.mxu0 %v620
  %745 = vmatprep.subr.bf16.mxu0 0
  %746 = vmatpush1.bf16.msra.mxu0 %v621
  %747 = vmatprep.subr.bf16.mxu0 0
  %748 = vmatpush1.bf16.msra.mxu0 %v622
  %749 = vmatprep.subr.bf16.mxu0 0
  %750 = vmatpush1.bf16.msra.mxu0 %v623
  %751 = vmatprep.subr.bf16.mxu0 0
  %752 = vmatpush1.bf16.msra.mxu0 %v624
  %753 = vmatprep.subr.bf16.mxu0 0
  %754 = vmatpush1.bf16.msra.mxu0 0
  %755 = vmatprep.subr.bf16.mxu0 0
  %756 = vmatpush1.bf16.msra.mxu0 0
  %757 = vmatprep.subr.bf16.mxu0 0
  %758 = vmatpush1.bf16.msra.mxu0 0
  %759 = vmatprep.subr.bf16.mxu0 0
  %760 = vmatpush1.bf16.msra.mxu0 0
  %761 = vmatprep.subr.bf16.mxu0 0
  %762 = vmatpush1.bf16.msra.mxu0 0
  %763 = vmatprep.subr.bf16.mxu0 0
  %764 = vmatpush1.bf16.msra.mxu0 0
  %765 = vmatprep.subr.bf16.mxu0 0
  %766 = vmatpush1.bf16.msra.mxu0 0
  %767 = vmatprep.subr.bf16.mxu0 0
  %768 = vmatpush1.bf16.msra.mxu0 0
  %769 = vmatprep.mubr.bf16.mxu0 0
  %770 = vmatmul.mubr.bf16.gmra.mrb[0].mxu0 %v721
  %v771 = vpop.f32.mrb[0].mxu0
  %v772 = vadd.f32 %v627, %v771
  %v773 = vpop.f32.mrb[0].mxu0
  %v774 = vpop.f32.mrb[0].mxu0
  %v775 = vadd.f32 %v631, %v774
  %v776 = vpop.f32.mrb[0].mxu0
  %777 = vmatprep.mubr.bf16.mxu0 0
  %778 = vmatmul.mubr.bf16.gmra.mrb[0].mxu0 %v722
  %v779 = vpop.f32.mrb[0].mxu0
  %v780 = vadd.f32 %v635, %v779
  %v781 = vpop.f32.mrb[0].mxu0
  %v782 = vpop.f32.mrb[0].mxu0
  %v783 = vadd.f32 %v639, %v782
  %v784 = vpop.f32.mrb[0].mxu0
  %785 = vmatprep.mubr.bf16.mxu0 0
  %786 = vmatmul.mubr.bf16.gmra.mrb[0].mxu0 %v723
  %v787 = vpop.f32.mrb[0].mxu0
  %v788 = vadd.f32 %v643, %v787
  %v789 = vpop.f32.mrb[0].mxu0
  %v790 = vpop.f32.mrb[0].mxu0
  %v791 = vadd.f32 %v647, %v790
  %v792 = vpop.f32.mrb[0].mxu0
  %793 = vmatprep.mubr.bf16.mxu0 0
  %794 = vmatmul.mubr.bf16.gmra.mrb[0].mxu0 %v724
  %v795 = vpop.f32.mrb[0].mxu0
  %v796 = vadd.f32 %v651, %v795
  %v797 = vpop.f32.mrb[0].mxu0
  %v798 = vpop.f32.mrb[0].mxu0
  %v799 = vadd.f32 %v655, %v798
  %v800 = vpop.f32.mrb[0].mxu0
  %801 = vmatprep.mubr.bf16.mxu0 0
  %802 = vmatmul.mubr.bf16.gmra.mrb[0].mxu0 %v725
  %v803 = vpop.f32.mrb[0].mxu0
  %v804 = vadd.f32 %v659, %v803
  %v805 = vpop.f32.mrb[0].mxu0
  %v806 = vpop.f32.mrb[0].mxu0
  %v807 = vadd.f32 %v663, %v806
  %v808 = vpop.f32.mrb[0].mxu0
  %809 = vmatprep.mubr.bf16.mxu0 0
  %810 = vmatmul.mubr.bf16.gmra.mrb[0].mxu0 %v726
  %v811 = vpop.f32.mrb[0].mxu0
  %v812 = vadd.f32 %v667, %v811
  %v813 = vpop.f32.mrb[0].mxu0
  %v814 = vpop.f32.mrb[0].mxu0
  %v815 = vadd.f32 %v671, %v814
  %v816 = vpop.f32.mrb[0].mxu0
  %817 = vmatprep.mubr.bf16.mxu0 0
  %818 = vmatmul.mubr.bf16.gmra.mrb[0].mxu0 %v727
  %v819 = vpop.f32.mrb[0].mxu0
  %v820 = vadd.f32 %v675, %v819
  %v821 = vpop.f32.mrb[0].mxu0
  %v822 = vpop.f32.mrb[0].mxu0
  %v823 = vadd.f32 %v679, %v822
  %v824 = vpop.f32.mrb[0].mxu0
  %825 = vmatprep.mubr.bf16.mxu0 0
  %826 = vmatmul.mubr.bf16.gmra.mrb[0].mxu0 %v728
  %v827 = vpop.f32.mrb[0].mxu0
  %v828 = vadd.f32 %v683, %v827
  %v829 = vpop.f32.mrb[0].mxu0
  %v830 = vpop.f32.mrb[0].mxu0
  %v831 = vadd.f32 %v687, %v830
  %v832 = vpop.f32.mrb[0].mxu0
  %833 = vdwg.mxu0
  %v834 = vmax.f32 %v772, 0.0
  %v835 = vmax.f32 %v775, 0.0
  %v836 = vmax.f32 %v780, 0.0
  %v837 = vmax.f32 %v783, 0.0
  %v838 = vmax.f32 %v788, 0.0
  %v839 = vmax.f32 %v791, 0.0
  %v840 = vmax.f32 %v796, 0.0
  %v841 = vmax.f32 %v799, 0.0
  %v842 = vmax.f32 %v804, 0.0
  %v843 = vmax.f32 %v807, 0.0
  %v844 = vmax.f32 %v812, 0.0
  %v845 = vmax.f32 %v815, 0.0
  %v846 = vmax.f32 %v820, 0.0
  %v847 = vmax.f32 %v823, 0.0
  %v848 = vmax.f32 %v828, 0.0
  %v849 = vmax.f32 %v831, 0.0
  %v850 = vld [vmem:[%s1 + $0xc0] sm:$0xf]
  %v851 = vld [vmem:[%s1 + $0xc4] sm:$0xf]
  %v852 = vld [vmem:[%s1 + $0xc8] sm:$0xf]
  %v853 = vld [vmem:[%s1 + $0xcc] sm:$0xf]
  %v854 = vld [vmem:[%s1 + $0xd0] sm:$0xf]
  %v855 = vld [vmem:[%s1 + $0xd4] sm:$0xf]
  %v856 = vld [vmem:[%s1 + $0xd8] sm:$0xf]
  %v857 = vld [vmem:[%s1 + $0xdc] sm:$0xf]
  %v858 = vld [vmem:[%s1 + $0xe0] sm:$0xf]
  %v859 = vld [vmem:[%s1 + $0xe4] sm:$0xf]
  %v860 = vld [vmem:[%s1 + $0xe8] sm:$0xf]
  %v861 = vld [vmem:[%s1 + $0xec] sm:$0xf]
  %v862 = vld [vmem:[%s1 + $0xf0] sm:$0xf]
  %v863 = vld [vmem:[%s1 + $0xf4] sm:$0xf]
  %v864 = vld [vmem:[%s1 + $0xf8] sm:$0xf]
  %v865 = vld [vmem:[%s1 + $0xfc] sm:$0xf]
  %v866 = vpack.c.bf16 %v835, %v834
  %v867 = vpack.c.bf16 %v837, %v836
  %v868 = vpack.c.bf16 %v839, %v838
  %v869 = vpack.c.bf16 %v841, %v840
  %v870 = vpack.c.bf16 %v843, %v842
  %v871 = vpack.c.bf16 %v845, %v844
  %v872 = vpack.c.bf16 %v847, %v846
  %v873 = vpack.c.bf16 %v849, %v848
  %874 = vset.pattern.permute.xlu0 3
  %875 = vperm.xlu0 %874, %v47
  %v876 = vpop.permute.xlu0 %875
  %878 = vset.pattern.permute.xlu0 3
  %879 = vperm.xlu0 %878, %v48
  %v880 = vpop.permute.xlu0 %879
  %882 = vset.pattern.permute.xlu0 3
  %883 = vperm.xlu0 %882, %v49
  %v884 = vpop.permute.xlu0 %883
  %886 = vset.pattern.permute.xlu0 3
  %887 = vperm.xlu0 %886, %v50
  %v888 = vpop.permute.xlu0 %887
  %890 = vset.pattern.permute.xlu0 3
  %891 = vperm.xlu0 %890, %v51
  %v892 = vpop.permute.xlu0 %891
  %894 = vset.pattern.permute.xlu0 3
  %895 = vperm.xlu0 %894, %v52
  %v896 = vpop.permute.xlu0 %895
  %898 = vset.pattern.permute.xlu0 3
  %899 = vperm.xlu0 %898, %v53
  %v900 = vpop.permute.xlu0 %899
  %902 = vset.pattern.permute.xlu0 3
  %903 = vperm.xlu0 %902, %v54
  %v904 = vpop.permute.xlu0 %903
  %906 = vset.pattern.permute.xlu0 3
  %907 = vperm.xlu0 %906, %v55
  %v908 = vpop.permute.xlu0 %907
  %910 = vset.pattern.permute.xlu0 3
  %911 = vperm.xlu0 %910, %v56
  %v912 = vpop.permute.xlu0 %911
  %914 = vset.pattern.permute.xlu0 3
  %915 = vperm.xlu0 %914, %v57
  %v916 = vpop.permute.xlu0 %915
  %918 = vset.pattern.permute.xlu0 3
  %919 = vperm.xlu0 %918, %v58
  %v920 = vpop.permute.xlu0 %919
  %922 = vset.pattern.permute.xlu0 3
  %923 = vperm.xlu0 %922, %v59
  %v924 = vpop.permute.xlu0 %923
  %926 = vset.pattern.permute.xlu0 3
  %927 = vperm.xlu0 %926, %v60
  %v928 = vpop.permute.xlu0 %927
  %930 = vset.pattern.permute.xlu0 3
  %931 = vperm.xlu0 %930, %v61
  %v932 = vpop.permute.xlu0 %931
  %934 = vset.pattern.permute.xlu0 3
  %935 = vperm.xlu0 %934, %v62
  %v936 = vpop.permute.xlu0 %935
  %v954 = vunpack.c.l.b16 %v850
  %v955 = vunpack.c.l.b16 %v851
  %v956 = vunpack.c.l.b16 %v852
  %v957 = vunpack.c.l.b16 %v853
  %v958 = vunpack.c.l.b16 %v854
  %v959 = vunpack.c.l.b16 %v855
  %v960 = vunpack.c.l.b16 %v856
  %v961 = vunpack.c.l.b16 %v857
  %v962 = vunpack.c.l.b16 %v858
  %v963 = vunpack.c.l.b16 %v859
  %v964 = vunpack.c.l.b16 %v860
  %v965 = vunpack.c.l.b16 %v861
  %v966 = vunpack.c.l.b16 %v862
  %v967 = vunpack.c.l.b16 %v863
  %v968 = vunpack.c.l.b16 %v864
  %v969 = vunpack.c.l.b16 %v865
  %v970 = vpack.c.b16 %v955, %v954
  %v971 = vpack.c.b16 %v957, %v956
  %v972 = vpack.c.b16 %v959, %v958
  %v973 = vpack.c.b16 %v961, %v960
  %v974 = vpack.c.b16 %v963, %v962
  %v975 = vpack.c.b16 %v965, %v964
  %v976 = vpack.c.b16 %v967, %v966
  %v977 = vpack.c.b16 %v969, %v968
  %986 = vmatprep.subr.bf16.mxu0 0
  %987 = vmatpush1.bf16.msra.mxu0 %v866
  %988 = vmatprep.subr.bf16.mxu0 0
  %989 = vmatpush1.bf16.msra.mxu0 %v867
  %990 = vmatprep.subr.bf16.mxu0 0
  %991 = vmatpush1.bf16.msra.mxu0 %v868
  %992 = vmatprep.subr.bf16.mxu0 0
  %993 = vmatpush1.bf16.msra.mxu0 %v869
  %994 = vmatprep.subr.bf16.mxu0 0
  %995 = vmatpush1.bf16.msra.mxu0 %v870
  %996 = vmatprep.subr.bf16.mxu0 0
  %997 = vmatpush1.bf16.msra.mxu0 %v871
  %998 = vmatprep.subr.bf16.mxu0 0
  %999 = vmatpush1.bf16.msra.mxu0 %v872
  %1000 = vmatprep.subr.bf16.mxu0 0
  %1001 = vmatpush1.bf16.msra.mxu0 %v873
  %1002 = vmatprep.subr.bf16.mxu0 0
  %1003 = vmatpush1.bf16.msra.mxu0 0
  %1004 = vmatprep.subr.bf16.mxu0 0
  %1005 = vmatpush1.bf16.msra.mxu0 0
  %1006 = vmatprep.subr.bf16.mxu0 0
  %1007 = vmatpush1.bf16.msra.mxu0 0
  %1008 = vmatprep.subr.bf16.mxu0 0
  %1009 = vmatpush1.bf16.msra.mxu0 0
  %1010 = vmatprep.subr.bf16.mxu0 0
  %1011 = vmatpush1.bf16.msra.mxu0 0
  %1012 = vmatprep.subr.bf16.mxu0 0
  %1013 = vmatpush1.bf16.msra.mxu0 0
  %1014 = vmatprep.subr.bf16.mxu0 0
  %1015 = vmatpush1.bf16.msra.mxu0 0
  %1016 = vmatprep.subr.bf16.mxu0 0
  %1017 = vmatpush1.bf16.msra.mxu0 0
  %1018 = vmatprep.mubr.bf16.mxu0 0
  %1019 = vmatmul.mubr.bf16.gmra.mrb[0].mxu0 %v970
  %v1020 = vpop.f32.mrb[0].mxu0
  %v1021 = vadd.f32 %v876, %v1020
  %v1022 = vpop.f32.mrb[0].mxu0
  %v1023 = vpop.f32.mrb[0].mxu0
  %v1024 = vadd.f32 %v880, %v1023
  %v1025 = vpop.f32.mrb[0].mxu0
  %1026 = vmatprep.mubr.bf16.mxu0 0
  %1027 = vmatmul.mubr.bf16.gmra.mrb[0].mxu0 %v971
  %v1028 = vpop.f32.mrb[0].mxu0
  %v1029 = vadd.f32 %v884, %v1028
  %v1030 = vpop.f32.mrb[0].mxu0
  %v1031 = vpop.f32.mrb[0].mxu0
  %v1032 = vadd.f32 %v888, %v1031
  %v1033 = vpop.f32.mrb[0].mxu0
  %1034 = vmatprep.mubr.bf16.mxu0 0
  %1035 = vmatmul.mubr.bf16.gmra.mrb[0].mxu0 %v972
  %v1036 = vpop.f32.mrb[0].mxu0
  %v1037 = vadd.f32 %v892, %v1036
  %v1038 = vpop.f32.mrb[0].mxu0
  %v1039 = vpop.f32.mrb[0].mxu0
  %v1040 = vadd.f32 %v896, %v1039
  %v1041 = vpop.f32.mrb[0].mxu0
  %1042 = vmatprep.mubr.bf16.mxu0 0
  %1043 = vmatmul.mubr.bf16.gmra.mrb[0].mxu0 %v973
  %v1044 = vpop.f32.mrb[0].mxu0
  %v1045 = vadd.f32 %v900, %v1044
  %v1046 = vpop.f32.mrb[0].mxu0
  %v1047 = vpop.f32.mrb[0].mxu0
  %v1048 = vadd.f32 %v904, %v1047
  %v1049 = vpop.f32.mrb[0].mxu0
  %1050 = vmatprep.mubr.bf16.mxu0 0
  %1051 = vmatmul.mubr.bf16.gmra.mrb[0].mxu0 %v974
  %v1052 = vpop.f32.mrb[0].mxu0
  %v1053 = vadd.f32 %v908, %v1052
  %v1054 = vpop.f32.mrb[0].mxu0
  %v1055 = vpop.f32.mrb[0].mxu0
  %v1056 = vadd.f32 %v912, %v1055
  %v1057 = vpop.f32.mrb[0].mxu0
  %1058 = vmatprep.mubr.bf16.mxu0 0
  %1059 = vmatmul.mubr.bf16.gmra.mrb[0].mxu0 %v975
  %v1060 = vpop.f32.mrb[0].mxu0
  %v1061 = vadd.f32 %v916, %v1060
  %v1062 = vpop.f32.mrb[0].mxu0
  %v1063 = vpop.f32.mrb[0].mxu0
  %v1064 = vadd.f32 %v920, %v1063
  %v1065 = vpop.f32.mrb[0].mxu0
  %1066 = vmatprep.mubr.bf16.mxu0 0
  %1067 = vmatmul.mubr.bf16.gmra.mrb[0].mxu0 %v976
  %v1068 = vpop.f32.mrb[0].mxu0
  %v1069 = vadd.f32 %v924, %v1068
  %v1070 = vpop.f32.mrb[0].mxu0
  %v1071 = vpop.f32.mrb[0].mxu0
  %v1072 = vadd.f32 %v928, %v1071
  %v1073 = vpop.f32.mrb[0].mxu0
  %1074 = vmatprep.mubr.bf16.mxu0 0
  %1075 = vmatmul.mubr.bf16.gmra.mrb[0].mxu0 %v977
  %v1076 = vpop.f32.mrb[0].mxu0
  %v1077 = vadd.f32 %v932, %v1076
  %v1078 = vpop.f32.mrb[0].mxu0
  %v1079 = vpop.f32.mrb[0].mxu0
  %v1080 = vadd.f32 %v936, %v1079
  %v1081 = vpop.f32.mrb[0].mxu0
  %1082 = vdwg.mxu0
  %v1083 = vmax.f32 %v1021, 0.0
  %v1084 = vmax.f32 %v1024, 0.0
  %v1085 = vmax.f32 %v1029, 0.0
  %v1086 = vmax.f32 %v1032, 0.0
  %v1087 = vmax.f32 %v1037, 0.0
  %v1088 = vmax.f32 %v1040, 0.0
  %v1089 = vmax.f32 %v1045, 0.0
  %v1090 = vmax.f32 %v1048, 0.0
  %v1091 = vmax.f32 %v1053, 0.0
  %v1092 = vmax.f32 %v1056, 0.0
  %v1093 = vmax.f32 %v1061, 0.0
  %v1094 = vmax.f32 %v1064, 0.0
  %v1095 = vmax.f32 %v1069, 0.0
  %v1096 = vmax.f32 %v1072, 0.0
  %v1097 = vmax.f32 %v1077, 0.0
  %v1098 = vmax.f32 %v1080, 0.0
  %v1099 = vld [vmem:[%s1 + $0x100] sm:$0xf]
  %v1100 = vld [vmem:[%s1 + $0x104] sm:$0xf]
  %v1101 = vld [vmem:[%s1 + $0x108] sm:$0xf]
  %v1102 = vld [vmem:[%s1 + $0x10c] sm:$0xf]
  %v1103 = vld [vmem:[%s1 + $0x110] sm:$0xf]
  %v1104 = vld [vmem:[%s1 + $0x114] sm:$0xf]
  %v1105 = vld [vmem:[%s1 + $0x118] sm:$0xf]
  %v1106 = vld [vmem:[%s1 + $0x11c] sm:$0xf]
  %v1107 = vld [vmem:[%s1 + $0x120] sm:$0xf]
  %v1108 = vld [vmem:[%s1 + $0x124] sm:$0xf]
  %v1109 = vld [vmem:[%s1 + $0x128] sm:$0xf]
  %v1110 = vld [vmem:[%s1 + $0x12c] sm:$0xf]
  %v1111 = vld [vmem:[%s1 + $0x130] sm:$0xf]
  %v1112 = vld [vmem:[%s1 + $0x134] sm:$0xf]
  %v1113 = vld [vmem:[%s1 + $0x138] sm:$0xf]
  %v1114 = vld [vmem:[%s1 + $0x13c] sm:$0xf]
  %v1115 = vpack.c.bf16 %v1084, %v1083
  %v1116 = vpack.c.bf16 %v1086, %v1085
  %v1117 = vpack.c.bf16 %v1088, %v1087
  %v1118 = vpack.c.bf16 %v1090, %v1089
  %v1119 = vpack.c.bf16 %v1092, %v1091
  %v1120 = vpack.c.bf16 %v1094, %v1093
  %v1121 = vpack.c.bf16 %v1096, %v1095
  %v1122 = vpack.c.bf16 %v1098, %v1097
  %1123 = vset.pattern.permute.xlu0 4
  %1124 = vperm.xlu0 %1123, %v47
  %v1125 = vpop.permute.xlu0 %1124
  %1127 = vset.pattern.permute.xlu0 4
  %1128 = vperm.xlu0 %1127, %v48
  %v1129 = vpop.permute.xlu0 %1128
  %1131 = vset.pattern.permute.xlu0 4
  %1132 = vperm.xlu0 %1131, %v49
  %v1133 = vpop.permute.xlu0 %1132
  %1135 = vset.pattern.permute.xlu0 4
  %1136 = vperm.xlu0 %1135, %v50
  %v1137 = vpop.permute.xlu0 %1136
  %1139 = vset.pattern.permute.xlu0 4
  %1140 = vperm.xlu0 %1139, %v51
  %v1141 = vpop.permute.xlu0 %1140
  %1143 = vset.pattern.permute.xlu0 4
  %1144 = vperm.xlu0 %1143, %v52
  %v1145 = vpop.permute.xlu0 %1144
  %1147 = vset.pattern.permute.xlu0 4
  %1148 = vperm.xlu0 %1147, %v53
  %v1149 = vpop.permute.xlu0 %1148
  %1151 = vset.pattern.permute.xlu0 4
  %1152 = vperm.xlu0 %1151, %v54
  %v1153 = vpop.permute.xlu0 %1152
  %1155 = vset.pattern.permute.xlu0 4
  %1156 = vperm.xlu0 %1155, %v55
  %v1157 = vpop.permute.xlu0 %1156
  %1159 = vset.pattern.permute.xlu0 4
  %1160 = vperm.xlu0 %1159, %v56
  %v1161 = vpop.permute.xlu0 %1160
  %1163 = vset.pattern.permute.xlu0 4
  %1164 = vperm.xlu0 %1163, %v57
  %v1165 = vpop.permute.xlu0 %1164
  %1167 = vset.pattern.permute.xlu0 4
  %1168 = vperm.xlu0 %1167, %v58
  %v1169 = vpop.permute.xlu0 %1168
  %1171 = vset.pattern.permute.xlu0 4
  %1172 = vperm.xlu0 %1171, %v59
  %v1173 = vpop.permute.xlu0 %1172
  %1175 = vset.pattern.permute.xlu0 4
  %1176 = vperm.xlu0 %1175, %v60
  %v1177 = vpop.permute.xlu0 %1176
  %1179 = vset.pattern.permute.xlu0 4
  %1180 = vperm.xlu0 %1179, %v61
  %v1181 = vpop.permute.xlu0 %1180
  %1183 = vset.pattern.permute.xlu0 4
  %1184 = vperm.xlu0 %1183, %v62
  %v1185 = vpop.permute.xlu0 %1184
  %v1203 = vunpack.c.l.b16 %v1099
  %v1204 = vunpack.c.l.b16 %v1100
  %v1205 = vunpack.c.l.b16 %v1101
  %v1206 = vunpack.c.l.b16 %v1102
  %v1207 = vunpack.c.l.b16 %v1103
  %v1208 = vunpack.c.l.b16 %v1104
  %v1209 = vunpack.c.l.b16 %v1105
  %v1210 = vunpack.c.l.b16 %v1106
  %v1211 = vunpack.c.l.b16 %v1107
  %v1212 = vunpack.c.l.b16 %v1108
  %v1213 = vunpack.c.l.b16 %v1109
  %v1214 = vunpack.c.l.b16 %v1110
  %v1215 = vunpack.c.l.b16 %v1111
  %v1216 = vunpack.c.l.b16 %v1112
  %v1217 = vunpack.c.l.b16 %v1113
  %v1218 = vunpack.c.l.b16 %v1114
  %v1219 = vpack.c.b16 %v1204, %v1203
  %v1220 = vpack.c.b16 %v1206, %v1205
  %v1221 = vpack.c.b16 %v1208, %v1207
  %v1222 = vpack.c.b16 %v1210, %v1209
  %v1223 = vpack.c.b16 %v1212, %v1211
  %v1224 = vpack.c.b16 %v1214, %v1213
  %v1225 = vpack.c.b16 %v1216, %v1215
  %v1226 = vpack.c.b16 %v1218, %v1217
  %1235 = vmatprep.subr.bf16.mxu0 0
  %1236 = vmatpush1.bf16.msra.mxu0 %v1115
  %1237 = vmatprep.subr.bf16.mxu0 0
  %1238 = vmatpush1.bf16.msra.mxu0 %v1116
  %1239 = vmatprep.subr.bf16.mxu0 0
  %1240 = vmatpush1.bf16.msra.mxu0 %v1117
  %1241 = vmatprep.subr.bf16.mxu0 0
  %1242 = vmatpush1.bf16.msra.mxu0 %v1118
  %1243 = vmatprep.subr.bf16.mxu0 0
  %1244 = vmatpush1.bf16.msra.mxu0 %v1119
  %1245 = vmatprep.subr.bf16.mxu0 0
  %1246 = vmatpush1.bf16.msra.mxu0 %v1120
  %1247 = vmatprep.subr.bf16.mxu0 0
  %1248 = vmatpush1.bf16.msra.mxu0 %v1121
  %1249 = vmatprep.subr.bf16.mxu0 0
  %1250 = vmatpush1.bf16.msra.mxu0 %v1122
  %1251 = vmatprep.subr.bf16.mxu0 0
  %1252 = vmatpush1.bf16.msra.mxu0 0
  %1253 = vmatprep.subr.bf16.mxu0 0
  %1254 = vmatpush1.bf16.msra.mxu0 0
  %1255 = vmatprep.subr.bf16.mxu0 0
  %1256 = vmatpush1.bf16.msra.mxu0 0
  %1257 = vmatprep.subr.bf16.mxu0 0
  %1258 = vmatpush1.bf16.msra.mxu0 0
  %1259 = vmatprep.subr.bf16.mxu0 0
  %1260 = vmatpush1.bf16.msra.mxu0 0
  %1261 = vmatprep.subr.bf16.mxu0 0
  %1262 = vmatpush1.bf16.msra.mxu0 0
  %1263 = vmatprep.subr.bf16.mxu0 0
  %1264 = vmatpush1.bf16.msra.mxu0 0
  %1265 = vmatprep.subr.bf16.mxu0 0
  %1266 = vmatpush1.bf16.msra.mxu0 0
  %1267 = vmatprep.mubr.bf16.mxu0 0
  %1268 = vmatmul.mubr.bf16.gmra.mrb[0].mxu0 %v1219
  %v1269 = vpop.f32.mrb[0].mxu0
  %v1270 = vadd.f32 %v1125, %v1269
  %v1271 = vpop.f32.mrb[0].mxu0
  %v1272 = vpop.f32.mrb[0].mxu0
  %v1273 = vadd.f32 %v1129, %v1272
  %v1274 = vpop.f32.mrb[0].mxu0
  %1275 = vmatprep.mubr.bf16.mxu0 0
  %1276 = vmatmul.mubr.bf16.gmra.mrb[0].mxu0 %v1220
  %v1277 = vpop.f32.mrb[0].mxu0
  %v1278 = vadd.f32 %v1133, %v1277
  %v1279 = vpop.f32.mrb[0].mxu0
  %v1280 = vpop.f32.mrb[0].mxu0
  %v1281 = vadd.f32 %v1137, %v1280
  %v1282 = vpop.f32.mrb[0].mxu0
  %1283 = vmatprep.mubr.bf16.mxu0 0
  %1284 = vmatmul.mubr.bf16.gmra.mrb[0].mxu0 %v1221
  %v1285 = vpop.f32.mrb[0].mxu0
  %v1286 = vadd.f32 %v1141, %v1285
  %v1287 = vpop.f32.mrb[0].mxu0
  %v1288 = vpop.f32.mrb[0].mxu0
  %v1289 = vadd.f32 %v1145, %v1288
  %v1290 = vpop.f32.mrb[0].mxu0
  %1291 = vmatprep.mubr.bf16.mxu0 0
  %1292 = vmatmul.mubr.bf16.gmra.mrb[0].mxu0 %v1222
  %v1293 = vpop.f32.mrb[0].mxu0
  %v1294 = vadd.f32 %v1149, %v1293
  %v1295 = vpop.f32.mrb[0].mxu0
  %v1296 = vpop.f32.mrb[0].mxu0
  %v1297 = vadd.f32 %v1153, %v1296
  %v1298 = vpop.f32.mrb[0].mxu0
  %1299 = vmatprep.mubr.bf16.mxu0 0
  %1300 = vmatmul.mubr.bf16.gmra.mrb[0].mxu0 %v1223
  %v1301 = vpop.f32.mrb[0].mxu0
  %v1302 = vadd.f32 %v1157, %v1301
  %v1303 = vpop.f32.mrb[0].mxu0
  %v1304 = vpop.f32.mrb[0].mxu0
  %v1305 = vadd.f32 %v1161, %v1304
  %v1306 = vpop.f32.mrb[0].mxu0
  %1307 = vmatprep.mubr.bf16.mxu0 0
  %1308 = vmatmul.mubr.bf16.gmra.mrb[0].mxu0 %v1224
  %v1309 = vpop.f32.mrb[0].mxu0
  %v1310 = vadd.f32 %v1165, %v1309
  %v1311 = vpop.f32.mrb[0].mxu0
  %v1312 = vpop.f32.mrb[0].mxu0
  %v1313 = vadd.f32 %v1169, %v1312
  %v1314 = vpop.f32.mrb[0].mxu0
  %1315 = vmatprep.mubr.bf16.mxu0 0
  %1316 = vmatmul.mubr.bf16.gmra.mrb[0].mxu0 %v1225
  %v1317 = vpop.f32.mrb[0].mxu0
  %v1318 = vadd.f32 %v1173, %v1317
  %v1319 = vpop.f32.mrb[0].mxu0
  %v1320 = vpop.f32.mrb[0].mxu0
  %v1321 = vadd.f32 %v1177, %v1320
  %v1322 = vpop.f32.mrb[0].mxu0
  %1323 = vmatprep.mubr.bf16.mxu0 0
  %1324 = vmatmul.mubr.bf16.gmra.mrb[0].mxu0 %v1226
  %v1325 = vpop.f32.mrb[0].mxu0
  %v1326 = vadd.f32 %v1181, %v1325
  %v1327 = vpop.f32.mrb[0].mxu0
  %v1328 = vpop.f32.mrb[0].mxu0
  %v1329 = vadd.f32 %v1185, %v1328
  %v1330 = vpop.f32.mrb[0].mxu0
  %1331 = vdwg.mxu0
  %v1332 = vmax.f32 %v1270, 0.0
  %v1333 = vmax.f32 %v1273, 0.0
  %v1334 = vmax.f32 %v1278, 0.0
  %v1335 = vmax.f32 %v1281, 0.0
  %v1336 = vmax.f32 %v1286, 0.0
  %v1337 = vmax.f32 %v1289, 0.0
  %v1338 = vmax.f32 %v1294, 0.0
  %v1339 = vmax.f32 %v1297, 0.0
  %v1340 = vmax.f32 %v1302, 0.0
  %v1341 = vmax.f32 %v1305, 0.0
  %v1342 = vmax.f32 %v1310, 0.0
  %v1343 = vmax.f32 %v1313, 0.0
  %v1344 = vmax.f32 %v1318, 0.0
  %v1345 = vmax.f32 %v1321, 0.0
  %v1346 = vmax.f32 %v1326, 0.0
  %v1347 = vmax.f32 %v1329, 0.0
  %v1348 = vld [vmem:[%s1 + $0x140] sm:$0xf]
  %v1349 = vld [vmem:[%s1 + $0x144] sm:$0xf]
  %v1350 = vld [vmem:[%s1 + $0x148] sm:$0xf]
  %v1351 = vld [vmem:[%s1 + $0x14c] sm:$0xf]
  %v1352 = vld [vmem:[%s1 + $0x150] sm:$0xf]
  %v1353 = vld [vmem:[%s1 + $0x154] sm:$0xf]
  %v1354 = vld [vmem:[%s1 + $0x158] sm:$0xf]
  %v1355 = vld [vmem:[%s1 + $0x15c] sm:$0xf]
  %v1356 = vld [vmem:[%s1 + $0x160] sm:$0xf]
  %v1357 = vld [vmem:[%s1 + $0x164] sm:$0xf]
  %v1358 = vld [vmem:[%s1 + $0x168] sm:$0xf]
  %v1359 = vld [vmem:[%s1 + $0x16c] sm:$0xf]
  %v1360 = vld [vmem:[%s1 + $0x170] sm:$0xf]
  %v1361 = vld [vmem:[%s1 + $0x174] sm:$0xf]
  %v1362 = vld [vmem:[%s1 + $0x178] sm:$0xf]
  %v1363 = vld [vmem:[%s1 + $0x17c] sm:$0xf]
  %v1364 = vunpack.c.l.bf16 %v1348
  %v1365 = vunpack.c.l.bf16 %v1349
  %v1366 = vunpack.c.l.bf16 %v1350
  %v1367 = vunpack.c.l.bf16 %v1351
  %v1368 = vunpack.c.l.bf16 %v1352
  %v1369 = vunpack.c.l.bf16 %v1353
  %v1370 = vunpack.c.l.bf16 %v1354
  %v1371 = vunpack.c.l.bf16 %v1355
  %v1372 = vunpack.c.l.bf16 %v1356
  %v1373 = vunpack.c.l.bf16 %v1357
  %v1374 = vunpack.c.l.bf16 %v1358
  %v1375 = vunpack.c.l.bf16 %v1359
  %v1376 = vunpack.c.l.bf16 %v1360
  %v1377 = vunpack.c.l.bf16 %v1361
  %v1378 = vunpack.c.l.bf16 %v1362
  %v1379 = vunpack.c.l.bf16 %v1363
  %1381 = vset.pattern.permute.xlu0 0
  %1382 = vperm.xlu0 %1381, %v1364
  %v1383 = vpop.permute.xlu0 %1382
  %1386 = vset.pattern.permute.xlu0 0
  %1387 = vperm.xlu0 %1386, %v1365
  %v1388 = vpop.permute.xlu0 %1387
  %1391 = vset.pattern.permute.xlu0 0
  %1392 = vperm.xlu0 %1391, %v1366
  %v1393 = vpop.permute.xlu0 %1392
  %1396 = vset.pattern.permute.xlu0 0
  %1397 = vperm.xlu0 %1396, %v1367
  %v1398 = vpop.permute.xlu0 %1397
  %1401 = vset.pattern.permute.xlu0 0
  %1402 = vperm.xlu0 %1401, %v1368
  %v1403 = vpop.permute.xlu0 %1402
  %1406 = vset.pattern.permute.xlu0 0
  %1407 = vperm.xlu0 %1406, %v1369
  %v1408 = vpop.permute.xlu0 %1407
  %1411 = vset.pattern.permute.xlu0 0
  %1412 = vperm.xlu0 %1411, %v1370
  %v1413 = vpop.permute.xlu0 %1412
  %1416 = vset.pattern.permute.xlu0 0
  %1417 = vperm.xlu0 %1416, %v1371
  %v1418 = vpop.permute.xlu0 %1417
  %1421 = vset.pattern.permute.xlu0 0
  %1422 = vperm.xlu0 %1421, %v1372
  %v1423 = vpop.permute.xlu0 %1422
  %1426 = vset.pattern.permute.xlu0 0
  %1427 = vperm.xlu0 %1426, %v1373
  %v1428 = vpop.permute.xlu0 %1427
  %1431 = vset.pattern.permute.xlu0 0
  %1432 = vperm.xlu0 %1431, %v1374
  %v1433 = vpop.permute.xlu0 %1432
  %1436 = vset.pattern.permute.xlu0 0
  %1437 = vperm.xlu0 %1436, %v1375
  %v1438 = vpop.permute.xlu0 %1437
  %1441 = vset.pattern.permute.xlu0 0
  %1442 = vperm.xlu0 %1441, %v1376
  %v1443 = vpop.permute.xlu0 %1442
  %1446 = vset.pattern.permute.xlu0 0
  %1447 = vperm.xlu0 %1446, %v1377
  %v1448 = vpop.permute.xlu0 %1447
  %1451 = vset.pattern.permute.xlu0 0
  %1452 = vperm.xlu0 %1451, %v1378
  %v1453 = vpop.permute.xlu0 %1452
  %1456 = vset.pattern.permute.xlu0 0
  %1457 = vperm.xlu0 %1456, %v1379
  %v1458 = vpop.permute.xlu0 %1457
  %v1460 = vmul.f32 %v1383, %v1332
  %v1461 = vmul.f32 %v1388, %v1333
  %v1462 = vmul.f32 %v1393, %v1334
  %v1463 = vmul.f32 %v1398, %v1335
  %v1464 = vmul.f32 %v1403, %v1336
  %v1465 = vmul.f32 %v1408, %v1337
  %v1466 = vmul.f32 %v1413, %v1338
  %v1467 = vmul.f32 %v1418, %v1339
  %v1468 = vmul.f32 %v1423, %v1340
  %v1469 = vmul.f32 %v1428, %v1341
  %v1470 = vmul.f32 %v1433, %v1342
  %v1471 = vmul.f32 %v1438, %v1343
  %v1472 = vmul.f32 %v1443, %v1344
  %v1473 = vmul.f32 %v1448, %v1345
  %v1474 = vmul.f32 %v1453, %v1346
  %v1475 = vmul.f32 %v1458, %v1347
  %v1476 = vadd.f32 %v1460, %v1461
  %v1477 = vadd.f32 %v1476, %v1462
  %v1478 = vadd.f32 %v1477, %v1463
  %v1479 = vadd.f32 %v1478, %v1464
  %v1480 = vadd.f32 %v1479, %v1465
  %v1481 = vadd.f32 %v1480, %v1466
  %v1482 = vadd.f32 %v1481, %v1467
  %v1483 = vadd.f32 %v1482, %v1468
  %v1484 = vadd.f32 %v1483, %v1469
  %v1485 = vadd.f32 %v1484, %v1470
  %v1486 = vadd.f32 %v1485, %v1471
  %v1487 = vadd.f32 %v1486, %v1472
  %v1488 = vadd.f32 %v1487, %v1473
  %v1489 = vadd.f32 %v1488, %v1474
  %v1490 = vadd.f32 %v1489, %v1475
  %v1491 = vrot.slane %v1490, 4
  %v1492 = vadd.f32 %v1490, %v1491
  %v1493 = vrot.slane %v1492, 2
  %v1494 = vadd.f32 %v1492, %v1493
  %v1495 = vrot.slane %v1494, 1
  %v1496 = vadd.f32 %v1494, %v1495
  %v1497 = vld [vmem:[%s2] sm:$0x1]
  %1499 = vset.pattern.permute.xlu0 5
  %1500 = vperm.xlu0 %1499, %v1497
  %v1501 = vpop.permute.xlu0 %1500
  %v1503 = vadd.f32 %v1496, %v1501
  %1504 = vst [vmem:[%s3] sm:$0x1] %v1503
  // Predicated region
  $region14: #{valuenet_forward.1} parent=0 // pred_check
    _
  $region15: #{valuenet_forward.1} parent=0 // pred_check_branch
    %1506 = sbr.rel (0) target = $region17
  $region16: #{valuenet_forward.1} parent=0 // pred_region
    _
  $region17: #{valuenet_forward.1} parent=0 // pred_fallthru
    _
  // Predicated region
  $region18: #{valuenet_forward.1} parent=0 // pred_check
    _
  $region19: #{valuenet_forward.1} parent=0 // pred_check_branch
    %1508 = sbr.rel (0) target = $region21
  $region20: #{valuenet_forward.1} parent=0 // pred_region
    _
  $region21: #{valuenet_forward.1} parent=0 // pred_fallthru
    _

</llo_original>
